<compile_context>
chip_gen: v7x
topology: tpu7x:2x2x1
jax: 0.10.0
libtpu: 0.0.40
codegen_flags: <defaults>
</compile_context>

<pallas_src>
import jax
import jax.numpy as jnp
from jax import lax
from jax.experimental import pallas as pl
from jax.experimental.pallas import tpu as pltpu


def _round_up(x, m):
    return ((x + m - 1) // m) * m


def _mlp_kernel(x_ref, w1_ref, b1_ref, w2_ref, b2_ref, w3t_ref, b3t_ref, ot_ref):
    # Layer 1 + ReLU: MXU matmul with f32 accumulation; bias add / ReLU ride
    # in VPU slots (binding resource here is the input DMA, not VALU).
    h1 = jnp.dot(x_ref[...], w1_ref[...], preferred_element_type=jnp.float32)
    h1 = jnp.maximum(h1 + b1_ref[...], 0.0)

    # Layer 2 + ReLU.
    h2 = jnp.dot(h1.astype(w2_ref.dtype), w2_ref[...],
                 preferred_element_type=jnp.float32)
    h2 = jnp.maximum(h2 + b2_ref[...], 0.0)

    # Layer 3, emitted transposed:  out^T = W3^T-layout @ h2^T -> (out_size, TILE_B).
    # Contracting the last dim of both operands keeps this on the MXU (no
    # explicit transpose) and makes the output store lane-dense.
    out_t = lax.dot_general(
        w3t_ref[...], h2.astype(w3t_ref.dtype),
        dimension_numbers=(((1,), (1,)), ((), ())),
        preferred_element_type=jnp.float32)
    ot_ref[...] = out_t + b3t_ref[...]        # (out_size, 1) broadcasts over lanes


def mlp_forward(x, params, *, tile_b=512, compute_dtype=jnp.float32):
    """Fused forward: relu(x@w1+b1) -> relu(@w2+b2) -> @w3+b3.

    x: (batch, input_size) f32. params: dict with w1,b1,w2,b2,w3,b3 where
    weights are (in_features, out_features) and biases (1, out_features).
    """
    assert tile_b % 128 == 0, "tile_b must be a multiple of 128 (lane width)"
    w1, b1 = params["w1"], params["b1"]
    w2, b2 = params["w2"], params["b2"]
    w3, b3 = params["w3"], params["b3"]
    batch, in_size = x.shape
    out_size = w3.shape[1]

    # Never allocate a bigger tile than a tiny batch needs.
    tile_b = min(tile_b, _round_up(max(batch, 1), 128))
    padded = _round_up(batch, tile_b)
    if padded != batch:
        x = jnp.pad(x, ((0, padded - batch), (0, 0)))
    grid = (padded // tile_b,)

    # Optional bf16 MXU operands (accumulation stays f32 inside the kernel).
    x_in = x.astype(compute_dtype)
    w1_in = w1.astype(compute_dtype)
    w2_in = w2.astype(compute_dtype)
    w3t_in = jnp.transpose(w3).astype(compute_dtype)          # (out_size, hidden)
    b3t = jnp.reshape(b3, (out_size, 1)).astype(jnp.float32)  # (out_size, 1)

    # Constant index_map => block index never changes => operand stays
    # VMEM-resident across all grid steps (single DMA).
    const = lambda shape: pl.BlockSpec(shape, lambda i: (0,) * len(shape))

    out_t = pl.pallas_call(
        _mlp_kernel,
        out_shape=jax.ShapeDtypeStruct((out_size, padded), jnp.float32),
        grid=grid,
        in_specs=[
            pl.BlockSpec((tile_b, in_size), lambda i: (i, 0)),   # streamed x
            const(w1_in.shape), const(b1.shape),                 # VMEM-resident
            const(w2_in.shape), const(b2.shape),
            const(w3t_in.shape), const(b3t.shape),
        ],
        out_specs=pl.BlockSpec((out_size, tile_b), lambda i: (0, i)),
        compiler_params=pltpu.CompilerParams(
            dimension_semantics=("parallel",)),  # shard batch across v7x's 2 TCs
    )(x_in, w1_in, b1, w2_in, b2, w3t_in, b3t)

    # Layout plumbing only: bring the lane-dense (out_size, batch) slab back
    # to the module's (batch, out_size) convention and drop padding rows.
    return jnp.transpose(out_t)[:batch]


def init_params(key, input_size, output_size, hidden=24):
    """Deterministic init mimicking nn.Linear default (U[-1/sqrt(fan_in), +])."""
    keys = jax.random.split(key, 6)

    def linear(kw, kb, fan_in, fan_out):
        bound = 1.0 / jnp.sqrt(fan_in)
        w = jax.random.uniform(kw, (fan_in, fan_out), jnp.float32, -bound, bound)
        b = jax.random.uniform(kb, (1, fan_out), jnp.float32, -bound, bound)
        return w, b

    w1, b1 = linear(keys[0], keys[1], input_size, hidden)
    w2, b2 = linear(keys[2], keys[3], hidden, hidden)
    w3, b3 = linear(keys[4], keys[5], hidden, output_size)
    return {"w1": w1, "b1": b1, "w2": w2, "b2": b2, "w3": w3, "b3": b3}


def mlp_reference(x, p):
    h1 = jnp.maximum(x @ p["w1"] + p["b1"], 0.0)
    h2 = jnp.maximum(h1 @ p["w2"] + p["b2"], 0.0)
    return h2 @ p["w3"] + p["b3"]


if __name__ == "__main__":
    input_size = 32
    output_size = 8

    key = jax.random.PRNGKey(0)
    k_x, k_p, k_x2 = jax.random.split(key, 3)
    params = init_params(k_p, input_size, output_size)

    # Small batch (exercises the pad-to-one-tile path).
    x_small = jax.random.normal(k_x, (4, input_size), jnp.float32)
    out_small = jax.block_until_ready(mlp_forward(x_small, params))
    ref_small = mlp_reference(x_small, params)
    assert out_small.shape == (4, output_size)
    assert jnp.allclose(out_small, ref_small, atol=1e-5, rtol=1e-5), "small-batch mismatch"

    # Larger batch exercising a multi-step parallel grid (3 tiles of 128 rows).
    x_big = jax.random.normal(k_x2, (384, input_size), jnp.float32)
    out_big = jax.block_until_ready(mlp_forward(x_big, params, tile_b=128))
    ref_big = mlp_reference(x_big, params)
    assert out_big.shape == (384, output_size)
    assert jnp.allclose(out_big, ref_big, atol=1e-5, rtol=1e-5), "big-batch mismatch"

    print("KERNEL_OK")
</pallas_src>

<mosaic_0001>
module attributes {stable_mosaic.version = 11 : i64} {
  func.func @_mlp_kernel(%arg0: i32, %arg1: memref<128x32xf32, #tpu.memory_space<vmem>>, %arg2: memref<32x24xf32, #tpu.memory_space<vmem>>, %arg3: memref<1x24xf32, #tpu.memory_space<vmem>>, %arg4: memref<24x24xf32, #tpu.memory_space<vmem>>, %arg5: memref<1x24xf32, #tpu.memory_space<vmem>>, %arg6: memref<8x24xf32, #tpu.memory_space<vmem>>, %arg7: memref<8x1xf32, #tpu.memory_space<vmem>>, %arg8: memref<8x128xf32, #tpu.memory_space<vmem>>) attributes {dimension_semantics = [#tpu.dimension_semantics<parallel>], iteration_bounds = array<i64: 1>, scalar_prefetch = 0 : i64, scratch_operands = 0 : i64, tpu.core_type = #tpu.core_type<tc>, window_params = [{transform_indices = @transform_0, window_bounds = array<i64: 128, 32>}, {pipeline_mode = #tpu.pipeline_mode<synchronous>, transform_indices = @transform_1, window_bounds = array<i64: 32, 24>}, {pipeline_mode = #tpu.pipeline_mode<synchronous>, transform_indices = @transform_2, window_bounds = array<i64: 1, 24>}, {pipeline_mode = #tpu.pipeline_mode<synchronous>, transform_indices = @transform_3, window_bounds = array<i64: 24, 24>}, {pipeline_mode = #tpu.pipeline_mode<synchronous>, transform_indices = @transform_4, window_bounds = array<i64: 1, 24>}, {pipeline_mode = #tpu.pipeline_mode<synchronous>, transform_indices = @transform_5, window_bounds = array<i64: 8, 24>}, {pipeline_mode = #tpu.pipeline_mode<synchronous>, transform_indices = @transform_6, window_bounds = array<i64: 8, 1>}, {transform_indices = @transform_7, window_bounds = array<i64: 8, 128>}]} {
    %c0 = arith.constant 0 : index
    %c0_0 = arith.constant 0 : index
    %0 = vector.load %arg1[%c0, %c0_0] : memref<128x32xf32, #tpu.memory_space<vmem>>, vector<128x32xf32>
    %c0_1 = arith.constant 0 : index
    %c0_2 = arith.constant 0 : index
    %1 = vector.load %arg2[%c0_1, %c0_2] : memref<32x24xf32, #tpu.memory_space<vmem>>, vector<32x24xf32>
    %cst = arith.constant dense<0.000000e+00> : vector<128x24xf32>
    %2 = tpu.matmul %0, %1, %cst {dimension_numbers = #tpu.dot_dimension_numbers<[1], [0], [0], [1], [0, 0, 1, 1], [], []>} : vector<128x32xf32>, vector<32x24xf32>, vector<128x24xf32> -> vector<128x24xf32>
    %c0_3 = arith.constant 0 : index
    %c0_4 = arith.constant 0 : index
    %3 = vector.load %arg3[%c0_3, %c0_4] : memref<1x24xf32, #tpu.memory_space<vmem>>, vector<1x24xf32>
    %4 = vector.broadcast %3 : vector<1x24xf32> to vector<128x24xf32>
    %5 = arith.addf %2, %4 : vector<128x24xf32>
    %cst_5 = arith.constant 0.000000e+00 : f32
    %6 = vector.broadcast %cst_5 : f32 to vector<128x24xf32>
    %7 = arith.maximumf %5, %6 : vector<128x24xf32>
    %c0_6 = arith.constant 0 : index
    %c0_7 = arith.constant 0 : index
    %8 = vector.load %arg4[%c0_6, %c0_7] : memref<24x24xf32, #tpu.memory_space<vmem>>, vector<24x24xf32>
    %cst_8 = arith.constant dense<0.000000e+00> : vector<128x24xf32>
    %9 = tpu.matmul %7, %8, %cst_8 {dimension_numbers = #tpu.dot_dimension_numbers<[1], [0], [0], [1], [0, 0, 1, 1], [], []>} : vector<128x24xf32>, vector<24x24xf32>, vector<128x24xf32> -> vector<128x24xf32>
    %c0_9 = arith.constant 0 : index
    %c0_10 = arith.constant 0 : index
    %10 = vector.load %arg5[%c0_9, %c0_10] : memref<1x24xf32, #tpu.memory_space<vmem>>, vector<1x24xf32>
    %11 = vector.broadcast %10 : vector<1x24xf32> to vector<128x24xf32>
    %12 = arith.addf %9, %11 : vector<128x24xf32>
    %cst_11 = arith.constant 0.000000e+00 : f32
    %13 = vector.broadcast %cst_11 : f32 to vector<128x24xf32>
    %14 = arith.maximumf %12, %13 : vector<128x24xf32>
    %c0_12 = arith.constant 0 : index
    %c0_13 = arith.constant 0 : index
    %15 = vector.load %arg6[%c0_12, %c0_13] : memref<8x24xf32, #tpu.memory_space<vmem>>, vector<8x24xf32>
    %cst_14 = arith.constant dense<0.000000e+00> : vector<8x128xf32>
    %16 = tpu.matmul %15, %14, %cst_14 {dimension_numbers = #tpu.dot_dimension_numbers<[1], [1], [0], [0], [0, 0, 1, 0], [], []>} : vector<8x24xf32>, vector<128x24xf32>, vector<8x128xf32> -> vector<8x128xf32>
    %c0_15 = arith.constant 0 : index
    %c0_16 = arith.constant 0 : index
    %17 = vector.load %arg7[%c0_15, %c0_16] : memref<8x1xf32, #tpu.memory_space<vmem>>, vector<8x1xf32>
    %18 = vector.broadcast %17 : vector<8x1xf32> to vector<8x128xf32>
    %19 = arith.addf %16, %18 : vector<8x128xf32>
    %c0_17 = arith.constant 0 : index
    %c0_18 = arith.constant 0 : index
    %20 = vector.load %arg8[%c0_17, %c0_18] : memref<8x128xf32, #tpu.memory_space<vmem>>, vector<8x128xf32>
    tpu.vector_store %arg8[%c0_17, %c0_18], %19 {strides = array<i32>} : memref<8x128xf32, #tpu.memory_space<vmem>>, vector<8x128xf32>,
    return
  }
  func.func @transform_0(%arg0: i32) -> (i32, i32) {
    %c0_i32 = arith.constant 0 : i32
    %c0_i32_0 = arith.constant 0 : i32
    return %arg0, %c0_i32 : i32, i32
  }
  func.func @transform_1(%arg0: i32) -> (i32, i32) {
    %c0_i32 = arith.constant 0 : i32
    %c0_i32_0 = arith.constant 0 : i32
    %c0_i32_1 = arith.constant 0 : i32
    return %c0_i32, %c0_i32_0 : i32, i32
  }
  func.func @transform_2(%arg0: i32) -> (i32, i32) {
    %c0_i32 = arith.constant 0 : i32
    %c0_i32_0 = arith.constant 0 : i32
    %c0_i32_1 = arith.constant 0 : i32
    return %c0_i32, %c0_i32_0 : i32, i32
  }
  func.func @transform_3(%arg0: i32) -> (i32, i32) {
    %c0_i32 = arith.constant 0 : i32
    %c0_i32_0 = arith.constant 0 : i32
    %c0_i32_1 = arith.constant 0 : i32
    return %c0_i32, %c0_i32_0 : i32, i32
  }
  func.func @transform_4(%arg0: i32) -> (i32, i32) {
    %c0_i32 = arith.constant 0 : i32
    %c0_i32_0 = arith.constant 0 : i32
    %c0_i32_1 = arith.constant 0 : i32
    return %c0_i32, %c0_i32_0 : i32, i32
  }
  func.func @transform_5(%arg0: i32) -> (i32, i32) {
    %c0_i32 = arith.constant 0 : i32
    %c0_i32_0 = arith.constant 0 : i32
    %c0_i32_1 = arith.constant 0 : i32
    return %c0_i32, %c0_i32_0 : i32, i32
  }
  func.func @transform_6(%arg0: i32) -> (i32, i32) {
    %c0_i32 = arith.constant 0 : i32
    %c0_i32_0 = arith.constant 0 : i32
    %c0_i32_1 = arith.constant 0 : i32
    return %c0_i32, %c0_i32_0 : i32, i32
  }
  func.func @transform_7(%arg0: i32) -> (i32, i32) {
    %c0_i32 = arith.constant 0 : i32
    %c0_i32_0 = arith.constant 0 : i32
    return %c0_i32, %arg0 : i32, i32
  }
}

</mosaic_0001>

<llo_original>
// kernel: tpu_custom_call.1
$region0: #{tpu_custom_call.1}
  #allocation0 [shape = 'u32[]', space=smem, size = 0x4, offset = 0x4, fixed_abs, tag = 'smem constant byte address 0x4 - core index']
  #allocation1 [shape = 'u32[144,128]{1,0:T(1,128)}', space=vmem, size = 0x12000, scoped, tag = 'internal scratch']
  %s0 = inlined_call_operand.vmem [shape: f32[128,32], index: 0, kind: input, shape index: {}]
  %s1 = inlined_call_operand.vmem [shape: f32[32,24], index: 1, kind: input, shape index: {}]
  %s2 = inlined_call_operand.vmem [shape: f32[1,24], index: 2, kind: input, shape index: {}]
  %s3 = inlined_call_operand.vmem [shape: f32[24,24], index: 3, kind: input, shape index: {}]
  %s4 = inlined_call_operand.vmem [shape: f32[1,24], index: 4, kind: input, shape index: {}]
  %s5 = inlined_call_operand.vmem [shape: f32[8,24], index: 5, kind: input, shape index: {}]
  %s6 = inlined_call_operand.vmem [shape: f32[8,1], index: 6, kind: input, shape index: {}]
  %s7 = inlined_call_operand.hbm [shape: f32[8,128], index: 7, kind: output, shape index: {}]
  %s8 = sld [smem:[#allocation0]]
  $region38: #{tpu_custom_call.1} parent=0
    _
  %s10 = ssub.s32 1, %s8
  %s11 = scalar_select 0, %s10, %s8
  $region1: #{tpu_custom_call.1} parent=0
    #allocation2 [shape = 'u8[4096]{0}', space=vmem, size = 0x1000, scoped, tag = 'output window, operand 0, single buffered']
    #allocation3 [shape = 's32[1]{0}', space=sflag, size = 0x4, scoped, tag = 'scoped memory for tpu_custom_call.1']
    %12 = vsyncpa [#allocation3], 0
    // Predicated region
    $region2: #{tpu_custom_call.1} parent=1 // pred_check
      _
    $region3: #{tpu_custom_call.1} parent=1 // pred_check_branch
      %14 = sbr.rel (0) target = $region5
    $region4: #{tpu_custom_call.1} parent=1 // pred_region
      _
    $region5: #{tpu_custom_call.1} parent=1 // pred_fallthru
      _
    // Predicated region
    $region6: #{tpu_custom_call.1} parent=1 // pred_check
      _
    $region7: #{tpu_custom_call.1} parent=1 // pred_check_branch
      %16 = sbr.rel (0) target = $region9
    $region8: #{tpu_custom_call.1} parent=1 // pred_region
      _
    $region9: #{tpu_custom_call.1} parent=1 // pred_fallthru
      _
    // Predicated region
    $region10: #{tpu_custom_call.1} parent=1 // pred_check
      _
    $region11: #{tpu_custom_call.1} parent=1 // pred_check_branch
      %18 = sbr.rel (0) target = $region13
    $region12: #{tpu_custom_call.1} parent=1 // pred_region
      _
    $region13: #{tpu_custom_call.1} parent=1 // pred_fallthru
      _
    // Predicated region
    $region14: #{tpu_custom_call.1} parent=1 // pred_check
      _
    $region15: #{tpu_custom_call.1} parent=1 // pred_check_branch
      %20 = sbr.rel (0) target = $region17
    $region16: #{tpu_custom_call.1} parent=1 // pred_region
      _
    $region17: #{tpu_custom_call.1} parent=1 // pred_fallthru
      _
    // Predicated region
    $region18: #{tpu_custom_call.1} parent=1 // pred_check
      _
    $region19: #{tpu_custom_call.1} parent=1 // pred_check_branch
      %22 = sbr.rel (0) target = $region21
    $region20: #{tpu_custom_call.1} parent=1 // pred_region
      _
    $region21: #{tpu_custom_call.1} parent=1 // pred_fallthru
      _
    // Predicated region
    $region22: #{tpu_custom_call.1} parent=1 // pred_check
      _
    $region23: #{tpu_custom_call.1} parent=1 // pred_check_branch
      %24 = sbr.rel (0) target = $region25
    $region24: #{tpu_custom_call.1} parent=1 // pred_region
      _
    $region25: #{tpu_custom_call.1} parent=1 // pred_fallthru
      _
    // Predicated region
    $region26: #{tpu_custom_call.1} parent=1 // pred_check
      _
    $region27: #{tpu_custom_call.1} parent=1 // pred_check_branch
      %26 = sbr.rel (0) target = $region29
    $region28: #{tpu_custom_call.1} parent=1 // pred_region
      _
    $region29: #{tpu_custom_call.1} parent=1 // pred_fallthru
      _
    %v27 = vld [vmem:[%s0] sm:$0xff]
    %v28 = vld [vmem:[%s0 + $0x8] sm:$0xff]
    %v29 = vld [vmem:[%s0 + $0x10] sm:$0xff]
    %v30 = vld [vmem:[%s0 + $0x18] sm:$0xff]
    %v31 = vld [vmem:[%s0 + $0x20] sm:$0xff]
    %v32 = vld [vmem:[%s0 + $0x28] sm:$0xff]
    %v33 = vld [vmem:[%s0 + $0x30] sm:$0xff]
    %v34 = vld [vmem:[%s0 + $0x38] sm:$0xff]
    %v35 = vld [vmem:[%s0 + $0x40] sm:$0xff]
    %v36 = vld [vmem:[%s0 + $0x48] sm:$0xff]
    %v37 = vld [vmem:[%s0 + $0x50] sm:$0xff]
    %v38 = vld [vmem:[%s0 + $0x58] sm:$0xff]
    %v39 = vld [vmem:[%s0 + $0x60] sm:$0xff]
    %v40 = vld [vmem:[%s0 + $0x68] sm:$0xff]
    %v41 = vld [vmem:[%s0 + $0x70] sm:$0xff]
    %v42 = vld [vmem:[%s0 + $0x78] sm:$0xff]
    %v43 = vld [vmem:[%s1] sm:$0xff]
    %v44 = vld [vmem:[%s1 + $0x8] sm:$0xff]
    %v45 = vld [vmem:[%s1 + $0x10] sm:$0xff]
    %v46 = vld [vmem:[%s1 + $0x18] sm:$0xff]
    %v47 = vld [vmem:[%s2] sm:$0x1]
    %v49 = vlaneseq
    %v50 = vshrl.u32 %v49, 7
    %v51 = vsub.s32 0, %v50
    %v52 = vrot.slane %v47, %v51
    %vm54 = vcmask 261120
    %v56 = vsel %vm54, %v27, 0
    %v59 = vsel %vm54, %v28, 0
    %v62 = vsel %vm54, %v29, 0
    %v65 = vsel %vm54, %v30, 0
    %v68 = vsel %vm54, %v31, 0
    %v71 = vsel %vm54, %v32, 0
    %v74 = vsel %vm54, %v33, 0
    %v77 = vsel %vm54, %v34, 0
    %v80 = vsel %vm54, %v35, 0
    %v83 = vsel %vm54, %v36, 0
    %v86 = vsel %vm54, %v37, 0
    %v89 = vsel %vm54, %v38, 0
    %v92 = vsel %vm54, %v39, 0
    %v95 = vsel %vm54, %v40, 0
    %v98 = vsel %vm54, %v41, 0
    %v101 = vsel %vm54, %v42, 0
    %103 = vmatprep.subr.mxu0 0.0
    %104 = vmatpush1.msra.mxu0 %v43
    %105 = vmatprep.subr.mxu0 0.0
    %106 = vmatpush1.msra.mxu0 %v44
    %107 = vmatprep.subr.mxu0 0.0
    %108 = vmatpush1.msra.mxu0 %v45
    %109 = vmatprep.subr.mxu0 0.0
    %110 = vmatpush1.msra.mxu0 %v46
    %111 = vmatprep.subr.mxu0 0.0
    %112 = vmatpush1.msra.mxu0 0.0
    %113 = vmatprep.subr.mxu0 0.0
    %114 = vmatpush1.msra.mxu0 0.0
    %115 = vmatprep.subr.mxu0 0.0
    %116 = vmatpush1.msra.mxu0 0.0
    %117 = vmatprep.subr.mxu0 0.0
    %118 = vmatpush1.msra.mxu0 0.0
    %119 = vmatprep.subr.mxu0 0.0
    %120 = vmatpush1.msra.mxu0 0.0
    %121 = vmatprep.subr.mxu0 0.0
    %122 = vmatpush1.msra.mxu0 0.0
    %123 = vmatprep.subr.mxu0 0.0
    %124 = vmatpush1.msra.mxu0 0.0
    %125 = vmatprep.subr.mxu0 0.0
    %126 = vmatpush1.msra.mxu0 0.0
    %127 = vmatprep.subr.mxu0 0.0
    %128 = vmatpush1.msra.mxu0 0.0
    %129 = vmatprep.subr.mxu0 0.0
    %130 = vmatpush1.msra.mxu0 0.0
    %131 = vmatprep.subr.mxu0 0.0
    %132 = vmatpush1.msra.mxu0 0.0
    %133 = vmatprep.subr.mxu0 0.0
    %134 = vmatpush1.msra.mxu0 0.0
    %135 = vmatprep.subr.mxu0 0.0
    %136 = vmatpush1.msra.mxu0 0.0
    %137 = vmatprep.subr.mxu0 0.0
    %138 = vmatpush1.msra.mxu0 0.0
    %139 = vmatprep.subr.mxu0 0.0
    %140 = vmatpush1.msra.mxu0 0.0
    %141 = vmatprep.subr.mxu0 0.0
    %142 = vmatpush1.msra.mxu0 0.0
    %143 = vmatprep.subr.mxu0 0.0
    %144 = vmatpush1.msra.mxu0 0.0
    %145 = vmatprep.subr.mxu0 0.0
    %146 = vmatpush1.msra.mxu0 0.0
    %147 = vmatprep.subr.mxu0 0.0
    %148 = vmatpush1.msra.mxu0 0.0
    %149 = vmatprep.subr.mxu0 0.0
    %150 = vmatpush1.msra.mxu0 0.0
    %151 = vmatprep.subr.mxu0 0.0
    %152 = vmatpush1.msra.mxu0 0.0
    %153 = vmatprep.subr.mxu0 0.0
    %154 = vmatpush1.msra.mxu0 0.0
    %155 = vmatprep.subr.mxu0 0.0
    %156 = vmatpush1.msra.mxu0 0.0
    %157 = vmatprep.subr.mxu0 0.0
    %158 = vmatpush1.msra.mxu0 0.0
    %159 = vmatprep.subr.mxu0 0.0
    %160 = vmatpush1.msra.mxu0 0.0
    %161 = vmatprep.subr.mxu0 0.0
    %162 = vmatpush1.msra.mxu0 0.0
    %163 = vmatprep.subr.mxu0 0.0
    %164 = vmatpush1.msra.mxu0 0.0
    %165 = vmatprep.subr.mxu0 0.0
    %166 = vmatpush1.msra.mxu0 0.0
    %167 = vmatprep.mubr.f32.mxu0 0.0
    %168 = vmatmul.mubr.f32.gmra.mrb[0].mxu0 %v56
    %v169 = vpop.f32.mrb[0].mxu0
    %v170 = vadd.f32 %v52, %v169
    %v171 = vpop.f32.mrb[0].mxu0
    %172 = vmatprep.mubr.f32.mxu0 0.0
    %173 = vmatmul.mubr.f32.gmra.mrb[0].mxu0 %v59
    %v174 = vpop.f32.mrb[0].mxu0
    %v175 = vadd.f32 %v52, %v174
    %v176 = vpop.f32.mrb[0].mxu0
    %177 = vmatprep.mubr.f32.mxu0 0.0
    %178 = vmatmul.mubr.f32.gmra.mrb[0].mxu0 %v62
    %v179 = vpop.f32.mrb[0].mxu0
    %v180 = vadd.f32 %v52, %v179
    %v181 = vpop.f32.mrb[0].mxu0
    %182 = vmatprep.mubr.f32.mxu0 0.0
    %183 = vmatmul.mubr.f32.gmra.mrb[0].mxu0 %v65
    %v184 = vpop.f32.mrb[0].mxu0
    %v185 = vadd.f32 %v52, %v184
    %v186 = vpop.f32.mrb[0].mxu0
    %187 = vmatprep.mubr.f32.mxu0 0.0
    %188 = vmatmul.mubr.f32.gmra.mrb[0].mxu0 %v68
    %v189 = vpop.f32.mrb[0].mxu0
    %v190 = vadd.f32 %v52, %v189
    %v191 = vpop.f32.mrb[0].mxu0
    %192 = vmatprep.mubr.f32.mxu0 0.0
    %193 = vmatmul.mubr.f32.gmra.mrb[0].mxu0 %v71
    %v194 = vpop.f32.mrb[0].mxu0
    %v195 = vadd.f32 %v52, %v194
    %v196 = vpop.f32.mrb[0].mxu0
    %197 = vmatprep.mubr.f32.mxu0 0.0
    %198 = vmatmul.mubr.f32.gmra.mrb[0].mxu0 %v74
    %v199 = vpop.f32.mrb[0].mxu0
    %v200 = vadd.f32 %v52, %v199
    %v201 = vpop.f32.mrb[0].mxu0
    %202 = vmatprep.mubr.f32.mxu0 0.0
    %203 = vmatmul.mubr.f32.gmra.mrb[0].mxu0 %v77
    %v204 = vpop.f32.mrb[0].mxu0
    %v205 = vadd.f32 %v52, %v204
    %v206 = vpop.f32.mrb[0].mxu0
    %207 = vmatprep.mubr.f32.mxu0 0.0
    %208 = vmatmul.mubr.f32.gmra.mrb[0].mxu0 %v80
    %v209 = vpop.f32.mrb[0].mxu0
    %v210 = vadd.f32 %v52, %v209
    %v211 = vpop.f32.mrb[0].mxu0
    %212 = vmatprep.mubr.f32.mxu0 0.0
    %213 = vmatmul.mubr.f32.gmra.mrb[0].mxu0 %v83
    %v214 = vpop.f32.mrb[0].mxu0
    %v215 = vadd.f32 %v52, %v214
    %v216 = vpop.f32.mrb[0].mxu0
    %217 = vmatprep.mubr.f32.mxu0 0.0
    %218 = vmatmul.mubr.f32.gmra.mrb[0].mxu0 %v86
    %v219 = vpop.f32.mrb[0].mxu0
    %v220 = vadd.f32 %v52, %v219
    %v221 = vpop.f32.mrb[0].mxu0
    %222 = vmatprep.mubr.f32.mxu0 0.0
    %223 = vmatmul.mubr.f32.gmra.mrb[0].mxu0 %v89
    %v224 = vpop.f32.mrb[0].mxu0
    %v225 = vadd.f32 %v52, %v224
    %v226 = vpop.f32.mrb[0].mxu0
    %227 = vmatprep.mubr.f32.mxu0 0.0
    %228 = vmatmul.mubr.f32.gmra.mrb[0].mxu0 %v92
    %v229 = vpop.f32.mrb[0].mxu0
    %v230 = vadd.f32 %v52, %v229
    %v231 = vpop.f32.mrb[0].mxu0
    %232 = vmatprep.mubr.f32.mxu0 0.0
    %233 = vmatmul.mubr.f32.gmra.mrb[0].mxu0 %v95
    %v234 = vpop.f32.mrb[0].mxu0
    %v235 = vadd.f32 %v52, %v234
    %v236 = vpop.f32.mrb[0].mxu0
    %237 = vmatprep.mubr.f32.mxu0 0.0
    %238 = vmatmul.mubr.f32.gmra.mrb[0].mxu0 %v98
    %v239 = vpop.f32.mrb[0].mxu0
    %v240 = vadd.f32 %v52, %v239
    %v241 = vpop.f32.mrb[0].mxu0
    %242 = vmatprep.mubr.f32.mxu0 0.0
    %243 = vmatmul.mubr.f32.gmra.mrb[0].mxu0 %v101
    %v244 = vpop.f32.mrb[0].mxu0
    %v245 = vadd.f32 %v52, %v244
    %v246 = vpop.f32.mrb[0].mxu0
    %247 = vdwg.mxu0
    %v248 = vmax.f32 %v170, 0.0
    %v249 = vmax.f32 %v175, 0.0
    %v250 = vmax.f32 %v180, 0.0
    %v251 = vmax.f32 %v185, 0.0
    %v252 = vmax.f32 %v190, 0.0
    %v253 = vmax.f32 %v195, 0.0
    %v254 = vmax.f32 %v200, 0.0
    %v255 = vmax.f32 %v205, 0.0
    %v256 = vmax.f32 %v210, 0.0
    %v257 = vmax.f32 %v215, 0.0
    %v258 = vmax.f32 %v220, 0.0
    %v259 = vmax.f32 %v225, 0.0
    %v260 = vmax.f32 %v230, 0.0
    %v261 = vmax.f32 %v235, 0.0
    %v262 = vmax.f32 %v240, 0.0
    %v263 = vmax.f32 %v245, 0.0
    %v264 = vld [vmem:[%s3] sm:$0xff]
    %v265 = vld [vmem:[%s3 + $0x8] sm:$0xff]
    %v266 = vld [vmem:[%s3 + $0x10] sm:$0xff]
    %v267 = vld [vmem:[%s4] sm:$0x1]
    %v269 = vlaneseq
    %v270 = vshrl.u32 %v269, 7
    %v271 = vsub.s32 0, %v270
    %v272 = vrot.slane %v267, %v271
    %vm274 = vcmask 195584
    %v276 = vsel %vm274, %v248, 0
    %v279 = vsel %vm274, %v249, 0
    %v282 = vsel %vm274, %v250, 0
    %v285 = vsel %vm274, %v251, 0
    %v288 = vsel %vm274, %v252, 0
    %v291 = vsel %vm274, %v253, 0
    %v294 = vsel %vm274, %v254, 0
    %v297 = vsel %vm274, %v255, 0
    %v300 = vsel %vm274, %v256, 0
    %v303 = vsel %vm274, %v257, 0
    %v306 = vsel %vm274, %v258, 0
    %v309 = vsel %vm274, %v259, 0
    %v312 = vsel %vm274, %v260, 0
    %v315 = vsel %vm274, %v261, 0
    %v318 = vsel %vm274, %v262, 0
    %v321 = vsel %vm274, %v263, 0
    %323 = vmatprep.subr.mxu0 0.0
    %324 = vmatpush1.msra.mxu0 %v264
    %325 = vmatprep.subr.mxu0 0.0
    %326 = vmatpush1.msra.mxu0 %v265
    %327 = vmatprep.subr.mxu0 0.0
    %328 = vmatpush1.msra.mxu0 %v266
    %329 = vmatprep.subr.mxu0 0.0
    %330 = vmatpush1.msra.mxu0 0.0
    %331 = vmatprep.subr.mxu0 0.0
    %332 = vmatpush1.msra.mxu0 0.0
    %333 = vmatprep.subr.mxu0 0.0
    %334 = vmatpush1.msra.mxu0 0.0
    %335 = vmatprep.subr.mxu0 0.0
    %336 = vmatpush1.msra.mxu0 0.0
    %337 = vmatprep.subr.mxu0 0.0
    %338 = vmatpush1.msra.mxu0 0.0
    %339 = vmatprep.subr.mxu0 0.0
    %340 = vmatpush1.msra.mxu0 0.0
    %341 = vmatprep.subr.mxu0 0.0
    %342 = vmatpush1.msra.mxu0 0.0
    %343 = vmatprep.subr.mxu0 0.0
    %344 = vmatpush1.msra.mxu0 0.0
    %345 = vmatprep.subr.mxu0 0.0
    %346 = vmatpush1.msra.mxu0 0.0
    %347 = vmatprep.subr.mxu0 0.0
    %348 = vmatpush1.msra.mxu0 0.0
    %349 = vmatprep.subr.mxu0 0.0
    %350 = vmatpush1.msra.mxu0 0.0
    %351 = vmatprep.subr.mxu0 0.0
    %352 = vmatpush1.msra.mxu0 0.0
    %353 = vmatprep.subr.mxu0 0.0
    %354 = vmatpush1.msra.mxu0 0.0
    %355 = vmatprep.subr.mxu0 0.0
    %356 = vmatpush1.msra.mxu0 0.0
    %357 = vmatprep.subr.mxu0 0.0
    %358 = vmatpush1.msra.mxu0 0.0
    %359 = vmatprep.subr.mxu0 0.0
    %360 = vmatpush1.msra.mxu0 0.0
    %361 = vmatprep.subr.mxu0 0.0
    %362 = vmatpush1.msra.mxu0 0.0
    %363 = vmatprep.subr.mxu0 0.0
    %364 = vmatpush1.msra.mxu0 0.0
    %365 = vmatprep.subr.mxu0 0.0
    %366 = vmatpush1.msra.mxu0 0.0
    %367 = vmatprep.subr.mxu0 0.0
    %368 = vmatpush1.msra.mxu0 0.0
    %369 = vmatprep.subr.mxu0 0.0
    %370 = vmatpush1.msra.mxu0 0.0
    %371 = vmatprep.subr.mxu0 0.0
    %372 = vmatpush1.msra.mxu0 0.0
    %373 = vmatprep.subr.mxu0 0.0
    %374 = vmatpush1.msra.mxu0 0.0
    %375 = vmatprep.subr.mxu0 0.0
    %376 = vmatpush1.msra.mxu0 0.0
    %377 = vmatprep.subr.mxu0 0.0
    %378 = vmatpush1.msra.mxu0 0.0
    %379 = vmatprep.subr.mxu0 0.0
    %380 = vmatpush1.msra.mxu0 0.0
    %381 = vmatprep.subr.mxu0 0.0
    %382 = vmatpush1.msra.mxu0 0.0
    %383 = vmatprep.subr.mxu0 0.0
    %384 = vmatpush1.msra.mxu0 0.0
    %385 = vmatprep.subr.mxu0 0.0
    %386 = vmatpush1.msra.mxu0 0.0
    %387 = vmatprep.mubr.f32.mxu0 0.0
    %388 = vmatmul.mubr.f32.gmra.mrb[0].mxu0 %v276
    %v389 = vpop.f32.mrb[0].mxu0
    %v390 = vadd.f32 %v272, %v389
    %v391 = vpop.f32.mrb[0].mxu0
    %392 = vmatprep.mubr.f32.mxu0 0.0
    %393 = vmatmul.mubr.f32.gmra.mrb[0].mxu0 %v279
    %v394 = vpop.f32.mrb[0].mxu0
    %v395 = vadd.f32 %v272, %v394
    %v396 = vpop.f32.mrb[0].mxu0
    %397 = vmatprep.mubr.f32.mxu0 0.0
    %398 = vmatmul.mubr.f32.gmra.mrb[0].mxu0 %v282
    %v399 = vpop.f32.mrb[0].mxu0
    %v400 = vadd.f32 %v272, %v399
    %v401 = vpop.f32.mrb[0].mxu0
    %402 = vmatprep.mubr.f32.mxu0 0.0
    %403 = vmatmul.mubr.f32.gmra.mrb[0].mxu0 %v285
    %v404 = vpop.f32.mrb[0].mxu0
    %v405 = vadd.f32 %v272, %v404
    %v406 = vpop.f32.mrb[0].mxu0
    %407 = vmatprep.mubr.f32.mxu0 0.0
    %408 = vmatmul.mubr.f32.gmra.mrb[0].mxu0 %v288
    %v409 = vpop.f32.mrb[0].mxu0
    %v410 = vadd.f32 %v272, %v409
    %v411 = vpop.f32.mrb[0].mxu0
    %412 = vmatprep.mubr.f32.mxu0 0.0
    %413 = vmatmul.mubr.f32.gmra.mrb[0].mxu0 %v291
    %v414 = vpop.f32.mrb[0].mxu0
    %v415 = vadd.f32 %v272, %v414
    %v416 = vpop.f32.mrb[0].mxu0
    %417 = vmatprep.mubr.f32.mxu0 0.0
    %418 = vmatmul.mubr.f32.gmra.mrb[0].mxu0 %v294
    %v419 = vpop.f32.mrb[0].mxu0
    %v420 = vadd.f32 %v272, %v419
    %v421 = vpop.f32.mrb[0].mxu0
    %422 = vmatprep.mubr.f32.mxu0 0.0
    %423 = vmatmul.mubr.f32.gmra.mrb[0].mxu0 %v297
    %v424 = vpop.f32.mrb[0].mxu0
    %v425 = vadd.f32 %v272, %v424
    %v426 = vpop.f32.mrb[0].mxu0
    %427 = vmatprep.mubr.f32.mxu0 0.0
    %428 = vmatmul.mubr.f32.gmra.mrb[0].mxu0 %v300
    %v429 = vpop.f32.mrb[0].mxu0
    %v430 = vadd.f32 %v272, %v429
    %v431 = vpop.f32.mrb[0].mxu0
    %432 = vmatprep.mubr.f32.mxu0 0.0
    %433 = vmatmul.mubr.f32.gmra.mrb[0].mxu0 %v303
    %v434 = vpop.f32.mrb[0].mxu0
    %v435 = vadd.f32 %v272, %v434
    %v436 = vpop.f32.mrb[0].mxu0
    %437 = vmatprep.mubr.f32.mxu0 0.0
    %438 = vmatmul.mubr.f32.gmra.mrb[0].mxu0 %v306
    %v439 = vpop.f32.mrb[0].mxu0
    %v440 = vadd.f32 %v272, %v439
    %v441 = vpop.f32.mrb[0].mxu0
    %442 = vmatprep.mubr.f32.mxu0 0.0
    %443 = vmatmul.mubr.f32.gmra.mrb[0].mxu0 %v309
    %v444 = vpop.f32.mrb[0].mxu0
    %v445 = vadd.f32 %v272, %v444
    %v446 = vpop.f32.mrb[0].mxu0
    %447 = vmatprep.mubr.f32.mxu0 0.0
    %448 = vmatmul.mubr.f32.gmra.mrb[0].mxu0 %v312
    %v449 = vpop.f32.mrb[0].mxu0
    %v450 = vadd.f32 %v272, %v449
    %v451 = vpop.f32.mrb[0].mxu0
    %452 = vmatprep.mubr.f32.mxu0 0.0
    %453 = vmatmul.mubr.f32.gmra.mrb[0].mxu0 %v315
    %v454 = vpop.f32.mrb[0].mxu0
    %v455 = vadd.f32 %v272, %v454
    %v456 = vpop.f32.mrb[0].mxu0
    %457 = vmatprep.mubr.f32.mxu0 0.0
    %458 = vmatmul.mubr.f32.gmra.mrb[0].mxu0 %v318
    %v459 = vpop.f32.mrb[0].mxu0
    %v460 = vadd.f32 %v272, %v459
    %v461 = vpop.f32.mrb[0].mxu0
    %462 = vmatprep.mubr.f32.mxu0 0.0
    %463 = vmatmul.mubr.f32.gmra.mrb[0].mxu0 %v321
    %v464 = vpop.f32.mrb[0].mxu0
    %v465 = vadd.f32 %v272, %v464
    %v466 = vpop.f32.mrb[0].mxu0
    %467 = vdwg.mxu0
    %v468 = vmax.f32 %v390, 0.0
    %v469 = vmax.f32 %v395, 0.0
    %v470 = vmax.f32 %v400, 0.0
    %v471 = vmax.f32 %v405, 0.0
    %v472 = vmax.f32 %v410, 0.0
    %v473 = vmax.f32 %v415, 0.0
    %v474 = vmax.f32 %v420, 0.0
    %v475 = vmax.f32 %v425, 0.0
    %v476 = vmax.f32 %v430, 0.0
    %v477 = vmax.f32 %v435, 0.0
    %v478 = vmax.f32 %v440, 0.0
    %v479 = vmax.f32 %v445, 0.0
    %v480 = vmax.f32 %v450, 0.0
    %v481 = vmax.f32 %v455, 0.0
    %v482 = vmax.f32 %v460, 0.0
    %v483 = vmax.f32 %v465, 0.0
    %v484 = vld [vmem:[%s5] sm:$0xff]
    %v485 = vld [vmem:[%s6] sm:$0xff]
    %487 = vset.pattern.permute.xlu0 0
    %488 = vperm.xlu0 %487, %v485
    %v489 = vpop.permute.xlu0 %488
    %v492 = vsel %vm274, %v484, 0
    %v495 = vsel %vm274, %v468, 0
    %v498 = vsel %vm274, %v469, 0
    %v501 = vsel %vm274, %v470, 0
    %v504 = vsel %vm274, %v471, 0
    %v507 = vsel %vm274, %v472, 0
    %v510 = vsel %vm274, %v473, 0
    %v513 = vsel %vm274, %v474, 0
    %v516 = vsel %vm274, %v475, 0
    %v519 = vsel %vm274, %v476, 0
    %v522 = vsel %vm274, %v477, 0
    %v525 = vsel %vm274, %v478, 0
    %v528 = vsel %vm274, %v479, 0
    %v531 = vsel %vm274, %v480, 0
    %v534 = vsel %vm274, %v481, 0
    %v537 = vsel %vm274, %v482, 0
    %v540 = vsel %vm274, %v483, 0
    %542 = vmatprep.subr.mxu0 0.0
    %543 = vmatpush1.xpose.msra.mxu0 %v495
    %544 = vmatprep.subr.mxu0 0.0
    %545 = vmatpush1.xpose.msra.mxu0 %v498
    %546 = vmatprep.subr.mxu0 0.0
    %547 = vmatpush1.xpose.msra.mxu0 %v501
    %548 = vmatprep.subr.mxu0 0.0
    %549 = vmatpush1.xpose.msra.mxu0 %v504
    %550 = vmatprep.subr.mxu0 0.0
    %551 = vmatpush1.xpose.msra.mxu0 %v507
    %552 = vmatprep.subr.mxu0 0.0
    %553 = vmatpush1.xpose.msra.mxu0 %v510
    %554 = vmatprep.subr.mxu0 0.0
    %555 = vmatpush1.xpose.msra.mxu0 %v513
    %556 = vmatprep.subr.mxu0 0.0
    %557 = vmatpush1.xpose.msra.mxu0 %v516
    %558 = vmatprep.subr.mxu0 0.0
    %559 = vmatpush1.xpose.msra.mxu0 %v519
    %560 = vmatprep.subr.mxu0 0.0
    %561 = vmatpush1.xpose.msra.mxu0 %v522
    %562 = vmatprep.subr.mxu0 0.0
    %563 = vmatpush1.xpose.msra.mxu0 %v525
    %564 = vmatprep.subr.mxu0 0.0
    %565 = vmatpush1.xpose.msra.mxu0 %v528
    %566 = vmatprep.subr.mxu0 0.0
    %567 = vmatpush1.xpose.msra.mxu0 %v531
    %568 = vmatprep.subr.mxu0 0.0
    %569 = vmatpush1.xpose.msra.mxu0 %v534
    %570 = vmatprep.subr.mxu0 0.0
    %571 = vmatpush1.xpose.msra.mxu0 %v537
    %572 = vmatprep.subr.mxu0 0.0
    %573 = vmatpush1.xpose.msra.mxu0 %v540
    %574 = vmatprep.subr.mxu0 0.0
    %575 = vmatpush1.xpose.msra.mxu0 0.0
    %576 = vmatprep.subr.mxu0 0.0
    %577 = vmatpush1.xpose.msra.mxu0 0.0
    %578 = vmatprep.subr.mxu0 0.0
    %579 = vmatpush1.xpose.msra.mxu0 0.0
    %580 = vmatprep.subr.mxu0 0.0
    %581 = vmatpush1.xpose.msra.mxu0 0.0
    %582 = vmatprep.subr.mxu0 0.0
    %583 = vmatpush1.xpose.msra.mxu0 0.0
    %584 = vmatprep.subr.mxu0 0.0
    %585 = vmatpush1.xpose.msra.mxu0 0.0
    %586 = vmatprep.subr.mxu0 0.0
    %587 = vmatpush1.xpose.msra.mxu0 0.0
    %588 = vmatprep.subr.mxu0 0.0
    %589 = vmatpush1.xpose.msra.mxu0 0.0
    %590 = vmatprep.subr.mxu0 0.0
    %591 = vmatpush1.xpose.msra.mxu0 0.0
    %592 = vmatprep.subr.mxu0 0.0
    %593 = vmatpush1.xpose.msra.mxu0 0.0
    %594 = vmatprep.subr.mxu0 0.0
    %595 = vmatpush1.xpose.msra.mxu0 0.0
    %596 = vmatprep.subr.mxu0 0.0
    %597 = vmatpush1.xpose.msra.mxu0 0.0
    %598 = vmatprep.subr.mxu0 0.0
    %599 = vmatpush1.xpose.msra.mxu0 0.0
    %600 = vmatprep.subr.mxu0 0.0
    %601 = vmatpush1.xpose.msra.mxu0 0.0
    %602 = vmatprep.subr.mxu0 0.0
    %603 = vmatpush1.xpose.msra.mxu0 0.0
    %604 = vmatprep.subr.mxu0 0.0
    %605 = vmatpush1.xpose.msra.mxu0 0.0
    %606 = vmatprep.mubr.f32.mxu0 0.0
    %607 = vmatmul.mubr.f32.gmra.mrb[0].mxu0 %v492
    %v608 = vpop.f32.mrb[0].mxu0
    %v609 = vadd.f32 %v489, %v608
    %v610 = vpop.f32.mrb[0].mxu0
    %611 = vdwg.mxu0
    %612 = vst [vmem:[#allocation2] sm:$0xff] %v609
    // Predicated region
    $region30: #{tpu_custom_call.1} parent=1 // pred_check
      _
    $region31: #{tpu_custom_call.1} parent=1 // pred_check_branch
      %614 = sbr.rel (0) target = $region33
    $region32: #{tpu_custom_call.1} parent=1 // pred_region
      %s616 = ssub.s32 128, 128
      %617 = vsyncadd [#allocation3], %s616
      %s619 = sshll.u32 [#allocation2], 4
      %s620 = int_to_ptr.vmem [resolvable:$true] %s619
      %622 = dma.vmem_to_hbm [thread:$0]  %s620, 128, %s7, [#allocation3]
    $region33: #{tpu_custom_call.1} parent=1 // pred_fallthru
      _
    // Predicated region
    $region34: #{tpu_custom_call.1} parent=1 // pred_check
      _
    $region35: #{tpu_custom_call.1} parent=1 // pred_check_branch
      %624 = sbr.rel (0) target = $region37
    $region36: #{tpu_custom_call.1} parent=1 // pred_region
      %625 = dma.done [#allocation3], 128
    $region37: #{tpu_custom_call.1} parent=1 // pred_fallthru
      _
    %626 = vsyncpa [#allocation3], 1

</llo_original>
